<compile_context>
chip_gen: v6e
topology: v6e:2x2x1
jax: 0.10.0
libtpu: 0.0.40
codegen_flags: <defaults>
</compile_context>

<pallas_src>
import functools

import jax
import jax.numpy as jnp
from jax.experimental import pallas as pl
from jax.experimental.pallas import tpu as pltpu

# Stand-in for the module's global `hyperparams` dict.
HIDDEN_SIZE = 32   # hyperparams['hidden_layer_size']
GRU_HIDDEN = 32    # hyperparams['lstm_hidden_size']
NUM_LAYERS = 2     # hyperparams['lstm_num_layers']

STATE_DIM = 16
ACTION_DIM = 4
BATCH = 8


def dqn_gru_kernel(x_ref, w1t_ref, wih_ref, whh_ref, bias_ref, h0_ref, w2t_ref,
                   q_ref, hout_ref, *, num_layers, hidden_size, gru_hidden,
                   action_dim):
    H = gru_hidden
    L = num_layers

    # fc1 + fc2 biases live in the last row of the packed bias slab.
    b1 = bias_ref[L:L + 1, 0:hidden_size]                          # (1, hidden)
    b2 = bias_ref[L:L + 1, hidden_size:hidden_size + action_dim]   # (1, A)

    # fc1 + ReLU
    act = jnp.maximum(
        jnp.dot(x_ref[...], w1t_ref[...], preferred_element_type=jnp.float32)
        + b1,
        0.0,
    )

    # GRU with seq_len == 1 -> one cell step per layer.
    # PyTorch gate/column order is (r, z, n); weights pre-transposed so each
    # layer is exactly two lane-dense (B, K) @ (K, 3H) MXU dots.
    inp = act
    for l in range(L):
        h_prev = h0_ref[l]                                          # (B, H)
        gi = jnp.dot(inp, wih_ref[l], preferred_element_type=jnp.float32)
        gh = jnp.dot(h_prev, whh_ref[l], preferred_element_type=jnp.float32)

        b_rz = bias_ref[l:l + 1, 0:2 * H]          # bih_rz + bhh_rz (presummed)
        bi_n = bias_ref[l:l + 1, 2 * H:3 * H]      # bih_n
        bh_n = bias_ref[l:l + 1, 3 * H:4 * H]      # bhh_n (must stay inside r*(.))

        # One packed sigmoid over r||z (single EUP pass).
        rz = jax.nn.sigmoid(gi[:, :2 * H] + gh[:, :2 * H] + b_rz)   # (B, 2H)
        r = rz[:, :H]
        z = rz[:, H:]
        n = jnp.tanh(gi[:, 2 * H:] + bi_n + r * (gh[:, 2 * H:] + bh_n))
        # (1-z)*n + z*h_prev, rewritten with one fewer VALU op.
        h_new = n + z * (h_prev - n)

        hout_ref[l] = h_new
        inp = h_new

    # fc2
    q_ref[...] = (jnp.dot(inp, w2t_ref[...], preferred_element_type=jnp.float32)
                  + b2)


def init_params(key):
    """Deterministic init with PyTorch-style shapes (PyTorch weight layout)."""
    ks = jax.random.split(key, 4 + 4 * NUM_LAYERS)
    i = 0

    def unif(k, shape, fan_in):
        bound = 1.0 / jnp.sqrt(jnp.float32(fan_in))
        return jax.random.uniform(k, shape, jnp.float32, -bound, bound)

    params = {}
    params["w1"] = unif(ks[i], (HIDDEN_SIZE, STATE_DIM), STATE_DIM); i += 1
    params["b1"] = unif(ks[i], (HIDDEN_SIZE,), STATE_DIM); i += 1
    wih, whh, bih, bhh = [], [], [], []
    for l in range(NUM_LAYERS):
        in_sz = HIDDEN_SIZE if l == 0 else GRU_HIDDEN
        wih.append(unif(ks[i], (3 * GRU_HIDDEN, in_sz), GRU_HIDDEN)); i += 1
        whh.append(unif(ks[i], (3 * GRU_HIDDEN, GRU_HIDDEN), GRU_HIDDEN)); i += 1
        bih.append(unif(ks[i], (3 * GRU_HIDDEN,), GRU_HIDDEN)); i += 1
        bhh.append(unif(ks[i], (3 * GRU_HIDDEN,), GRU_HIDDEN)); i += 1
    params["wih"] = jnp.stack(wih)   # (L, 3H, in)
    params["whh"] = jnp.stack(whh)   # (L, 3H, H)
    params["bih"] = jnp.stack(bih)   # (L, 3H)
    params["bhh"] = jnp.stack(bhh)   # (L, 3H)
    params["w2"] = unif(ks[i], (ACTION_DIM, GRU_HIDDEN), GRU_HIDDEN); i += 1
    params["b2"] = unif(ks[i], (ACTION_DIM,), GRU_HIDDEN); i += 1
    return params


def prepare_params(params):
    """One-time re-layout of PyTorch weights for the fused kernel (hoisted
    out of the per-step forward path)."""
    L, H, A = NUM_LAYERS, GRU_HIDDEN, ACTION_DIM
    hidden = params["w1"].shape[0]
    assert hidden == GRU_HIDDEN, "layer-0 GRU input must match GRU hidden to stack wih"
    assert hidden + A <= 4 * H, "fc biases must fit in one 4H-wide bias row"

    w1t = params["w1"].T                           # (S, hidden)
    w2t = params["w2"].T                           # (H, A)
    wih = jnp.swapaxes(params["wih"], 1, 2)        # (L, in, 3H)  cols = r|z|n
    whh = jnp.swapaxes(params["whh"], 1, 2)        # (L, H, 3H)

    bih, bhh = params["bih"], params["bhh"]        # (L, 3H)
    b_rz = bih[:, :2 * H] + bhh[:, :2 * H]         # r/z biases may be pre-summed
    bi_n = bih[:, 2 * H:]                          # input-side n bias
    bh_n = bhh[:, 2 * H:]                          # hidden-side n bias (kept apart)
    gru_bias = jnp.concatenate([b_rz, bi_n, bh_n], axis=1)       # (L, 4H)

    fc_bias = jnp.zeros((1, 4 * H), jnp.float32)
    fc_bias = fc_bias.at[0, :hidden].set(params["b1"])
    fc_bias = fc_bias.at[0, hidden:hidden + A].set(params["b2"])
    bias_slab = jnp.concatenate([gru_bias, fc_bias], axis=0)     # (L+1, 4H)

    return {
        "w1t": jnp.asarray(w1t, jnp.float32),
        "wih": jnp.asarray(wih, jnp.float32),
        "whh": jnp.asarray(whh, jnp.float32),
        "bias": jnp.asarray(bias_slab, jnp.float32),
        "w2t": jnp.asarray(w2t, jnp.float32),
    }


@jax.jit
def _dqn_gru_forward_jit(x, w1t, wih, whh, bias, w2t, hidden_state):
    B = x.shape[0]
    H, L, A = GRU_HIDDEN, NUM_LAYERS, ACTION_DIM

    vspec = pl.BlockSpec(memory_space=pltpu.MemorySpace.VMEM)
    kernel = functools.partial(dqn_gru_kernel, num_layers=L,
                               hidden_size=HIDDEN_SIZE, gru_hidden=H,
                               action_dim=A)

    q, h_out = pl.pallas_call(
        kernel,
        out_shape=(
            jax.ShapeDtypeStruct((B, A), jnp.float32),
            jax.ShapeDtypeStruct((L, B, H), jnp.float32),
        ),
        in_specs=[vspec] * 7,
        out_specs=(vspec, vspec),
        # hidden_state (input 5) aliases the hidden-state output (output 1):
        # in-place recurrent update, no extra HBM buffer per RL step.
        input_output_aliases={5: 1},
    )(x, w1t, wih, whh, bias, hidden_state, w2t)
    return q, h_out


def dqn_gru_forward(x, prepared, hidden_state=None):
    """Pallas implementation of DQN_GRU.forward. Returns (q_values, hidden_state)."""
    if hidden_state is None:
        hidden_state = jnp.zeros((NUM_LAYERS, x.shape[0], GRU_HIDDEN),
                                 jnp.float32)
    return _dqn_gru_forward_jit(x, prepared["w1t"], prepared["wih"],
                                prepared["whh"], prepared["bias"],
                                prepared["w2t"], hidden_state)


def dqn_gru_reference(x, params, hidden_state=None):
    """Pure-JAX reference matching the PyTorch forward (for verification)."""
    H = GRU_HIDDEN
    L = NUM_LAYERS
    B = x.shape[0]
    if hidden_state is None:
        hidden_state = jnp.zeros((L, B, H), jnp.float32)
    a = jnp.maximum(x @ params["w1"].T + params["b1"], 0.0)
    inp = a
    hs = []
    for l in range(L):
        h_prev = hidden_state[l]
        gi = inp @ params["wih"][l].T + params["bih"][l]
        gh = h_prev @ params["whh"][l].T + params["bhh"][l]
        r = jax.nn.sigmoid(gi[:, :H] + gh[:, :H])
        z = jax.nn.sigmoid(gi[:, H:2 * H] + gh[:, H:2 * H])
        n = jnp.tanh(gi[:, 2 * H:] + r * gh[:, 2 * H:])
        h_new = (1.0 - z) * n + z * h_prev
        hs.append(h_new)
        inp = h_new
    q = inp @ params["w2"].T + params["b2"]
    return q, jnp.stack(hs)


if __name__ == "__main__":
    key = jax.random.PRNGKey(0)
    pkey, xkey = jax.random.split(key)
    params = init_params(pkey)
    prepared = prepare_params(params)       # one-time weight re-layout
    x = jax.random.normal(xkey, (BATCH, STATE_DIM), jnp.float32)

    # Path 1: hidden_state=None
    q1, h1 = dqn_gru_forward(x, prepared)
    q1 = jax.block_until_ready(q1)
    h1 = jax.block_until_ready(h1)
    q1_ref, h1_ref = dqn_gru_reference(x, params)
    assert q1.shape == (BATCH, ACTION_DIM)
    assert h1.shape == (NUM_LAYERS, BATCH, GRU_HIDDEN)
    assert jnp.allclose(q1, q1_ref, atol=1e-5, rtol=1e-5)
    assert jnp.allclose(h1, h1_ref, atol=1e-5, rtol=1e-5)

    # Path 2: recurrent step with an explicit hidden_state
    q2_ref, h2_ref = dqn_gru_reference(x, params, h1)
    q2, h2 = dqn_gru_forward(x, prepared, h1)
    q2 = jax.block_until_ready(q2)
    h2 = jax.block_until_ready(h2)
    assert jnp.allclose(q2, q2_ref, atol=1e-5, rtol=1e-5)
    assert jnp.allclose(h2, h2_ref, atol=1e-5, rtol=1e-5)

    print("KERNEL_OK")
</pallas_src>

<mosaic_0001>
module attributes {stable_mosaic.version = 11 : i64} {
  func.func @dqn_gru_kernel(%arg0: memref<8x16xf32, #tpu.memory_space<vmem>>, %arg1: memref<16x32xf32, #tpu.memory_space<vmem>>, %arg2: memref<2x32x96xf32, #tpu.memory_space<vmem>>, %arg3: memref<2x32x96xf32, #tpu.memory_space<vmem>>, %arg4: memref<3x128xf32, #tpu.memory_space<vmem>>, %arg5: memref<2x8x32xf32, #tpu.memory_space<vmem>>, %arg6: memref<32x4xf32, #tpu.memory_space<vmem>>, %arg7: memref<8x4xf32, #tpu.memory_space<vmem>>, %arg8: memref<2x8x32xf32, #tpu.memory_space<vmem>>) attributes {dimension_semantics = [], scalar_prefetch = 0 : i64, scratch_operands = 0 : i64, tpu.core_type = #tpu.core_type<tc>} {
    %c2 = arith.constant 2 : index
    %c0 = arith.constant 0 : index
    %0 = vector.load %arg4[%c2, %c0] : memref<3x128xf32, #tpu.memory_space<vmem>>, vector<1x32xf32>
    %c2_0 = arith.constant 2 : index
    %c32 = arith.constant 32 : index
    %1 = vector.load %arg4[%c2_0, %c32] : memref<3x128xf32, #tpu.memory_space<vmem>>, vector<1x4xf32>
    %c0_1 = arith.constant 0 : index
    %c0_2 = arith.constant 0 : index
    %2 = vector.load %arg0[%c0_1, %c0_2] : memref<8x16xf32, #tpu.memory_space<vmem>>, vector<8x16xf32>
    %c0_3 = arith.constant 0 : index
    %c0_4 = arith.constant 0 : index
    %3 = vector.load %arg1[%c0_3, %c0_4] : memref<16x32xf32, #tpu.memory_space<vmem>>, vector<16x32xf32>
    %cst = arith.constant dense<0.000000e+00> : vector<8x32xf32>
    %4 = tpu.matmul %2, %3, %cst {dimension_numbers = #tpu.dot_dimension_numbers<[1], [0], [0], [1], [0, 0, 1, 1], [], []>} : vector<8x16xf32>, vector<16x32xf32>, vector<8x32xf32> -> vector<8x32xf32>
    %5 = vector.broadcast %0 : vector<1x32xf32> to vector<8x32xf32>
    %6 = arith.addf %4, %5 : vector<8x32xf32>
    %cst_5 = arith.constant 0.000000e+00 : f32
    %7 = vector.broadcast %cst_5 : f32 to vector<8x32xf32>
    %8 = arith.maximumf %6, %7 : vector<8x32xf32>
    %c0_6 = arith.constant 0 : index
    %c0_7 = arith.constant 0 : index
    %c0_8 = arith.constant 0 : index
    %9 = vector.load %arg5[%c0_6, %c0_7, %c0_8] : memref<2x8x32xf32, #tpu.memory_space<vmem>>, vector<1x8x32xf32>
    %10 = vector.shape_cast %9 : vector<1x8x32xf32> to vector<8x32xf32>
    %c0_9 = arith.constant 0 : index
    %c0_10 = arith.constant 0 : index
    %c0_11 = arith.constant 0 : index
    %11 = vector.load %arg2[%c0_9, %c0_10, %c0_11] : memref<2x32x96xf32, #tpu.memory_space<vmem>>, vector<1x32x96xf32>
    %12 = vector.shape_cast %11 : vector<1x32x96xf32> to vector<32x96xf32>
    %cst_12 = arith.constant dense<0.000000e+00> : vector<8x96xf32>
    %13 = tpu.matmul %8, %12, %cst_12 {dimension_numbers = #tpu.dot_dimension_numbers<[1], [0], [0], [1], [0, 0, 1, 1], [], []>} : vector<8x32xf32>, vector<32x96xf32>, vector<8x96xf32> -> vector<8x96xf32>
    %c0_13 = arith.constant 0 : index
    %c0_14 = arith.constant 0 : index
    %c0_15 = arith.constant 0 : index
    %14 = vector.load %arg3[%c0_13, %c0_14, %c0_15] : memref<2x32x96xf32, #tpu.memory_space<vmem>>, vector<1x32x96xf32>
    %15 = vector.shape_cast %14 : vector<1x32x96xf32> to vector<32x96xf32>
    %cst_16 = arith.constant dense<0.000000e+00> : vector<8x96xf32>
    %16 = tpu.matmul %10, %15, %cst_16 {dimension_numbers = #tpu.dot_dimension_numbers<[1], [0], [0], [1], [0, 0, 1, 1], [], []>} : vector<8x32xf32>, vector<32x96xf32>, vector<8x96xf32> -> vector<8x96xf32>
    %c0_17 = arith.constant 0 : index
    %c0_18 = arith.constant 0 : index
    %17 = vector.load %arg4[%c0_17, %c0_18] : memref<3x128xf32, #tpu.memory_space<vmem>>, vector<1x64xf32>
    %c0_19 = arith.constant 0 : index
    %c64 = arith.constant 64 : index
    %18 = vector.load %arg4[%c0_19, %c64] : memref<3x128xf32, #tpu.memory_space<vmem>>, vector<1x32xf32>
    %c0_20 = arith.constant 0 : index
    %c96 = arith.constant 96 : index
    %19 = vector.load %arg4[%c0_20, %c96] : memref<3x128xf32, #tpu.memory_space<vmem>>, vector<1x32xf32>
    %20 = vector.extract_strided_slice %13 {offsets = [0, 0], sizes = [8, 64], strides = [1, 1]} : vector<8x96xf32> to vector<8x64xf32>
    %21 = vector.extract_strided_slice %16 {offsets = [0, 0], sizes = [8, 64], strides = [1, 1]} : vector<8x96xf32> to vector<8x64xf32>
    %22 = arith.addf %20, %21 : vector<8x64xf32>
    %23 = vector.broadcast %17 : vector<1x64xf32> to vector<8x64xf32>
    %24 = arith.addf %22, %23 : vector<8x64xf32>
    %25 = arith.negf %24 : vector<8x64xf32>
    %26 = math.exp %25 : vector<8x64xf32>
    %cst_21 = arith.constant 1.000000e+00 : f32
    %27 = vector.broadcast %cst_21 : f32 to vector<8x64xf32>
    %28 = arith.addf %27, %26 : vector<8x64xf32>
    %29 = arith.divf %27, %28 : vector<8x64xf32>
    %30 = vector.extract_strided_slice %29 {offsets = [0, 0], sizes = [8, 32], strides = [1, 1]} : vector<8x64xf32> to vector<8x32xf32>
    %31 = vector.extract_strided_slice %29 {offsets = [0, 32], sizes = [8, 32], strides = [1, 1]} : vector<8x64xf32> to vector<8x32xf32>
    %32 = vector.extract_strided_slice %13 {offsets = [0, 64], sizes = [8, 32], strides = [1, 1]} : vector<8x96xf32> to vector<8x32xf32>
    %33 = vector.broadcast %18 : vector<1x32xf32> to vector<8x32xf32>
    %34 = arith.addf %32, %33 : vector<8x32xf32>
    %35 = vector.extract_strided_slice %16 {offsets = [0, 64], sizes = [8, 32], strides = [1, 1]} : vector<8x96xf32> to vector<8x32xf32>
    %36 = vector.broadcast %19 : vector<1x32xf32> to vector<8x32xf32>
    %37 = arith.addf %35, %36 : vector<8x32xf32>
    %38 = arith.mulf %30, %37 : vector<8x32xf32>
    %39 = arith.addf %34, %38 : vector<8x32xf32>
    %40 = math.tanh %39 : vector<8x32xf32>
    %41 = arith.subf %10, %40 : vector<8x32xf32>
    %42 = arith.mulf %31, %41 : vector<8x32xf32>
    %43 = arith.addf %40, %42 : vector<8x32xf32>
    %c0_22 = arith.constant 0 : index
    %c0_23 = arith.constant 0 : index
    %c0_24 = arith.constant 0 : index
    %44 = vector.load %arg8[%c0_22, %c0_23, %c0_24] : memref<2x8x32xf32, #tpu.memory_space<vmem>>, vector<1x8x32xf32>
    %45 = vector.shape_cast %44 : vector<1x8x32xf32> to vector<8x32xf32>
    %46 = vector.shape_cast %43 : vector<8x32xf32> to vector<1x8x32xf32>
    tpu.vector_store %arg8[%c0_22, %c0_23, %c0_24], %46 {strides = array<i32>} : memref<2x8x32xf32, #tpu.memory_space<vmem>>, vector<1x8x32xf32>,
    %c1 = arith.constant 1 : index
    %c0_25 = arith.constant 0 : index
    %c0_26 = arith.constant 0 : index
    %47 = vector.load %arg5[%c1, %c0_25, %c0_26] : memref<2x8x32xf32, #tpu.memory_space<vmem>>, vector<1x8x32xf32>
    %48 = vector.shape_cast %47 : vector<1x8x32xf32> to vector<8x32xf32>
    %c1_27 = arith.constant 1 : index
    %c0_28 = arith.constant 0 : index
    %c0_29 = arith.constant 0 : index
    %49 = vector.load %arg2[%c1_27, %c0_28, %c0_29] : memref<2x32x96xf32, #tpu.memory_space<vmem>>, vector<1x32x96xf32>
    %50 = vector.shape_cast %49 : vector<1x32x96xf32> to vector<32x96xf32>
    %cst_30 = arith.constant dense<0.000000e+00> : vector<8x96xf32>
    %51 = tpu.matmul %43, %50, %cst_30 {dimension_numbers = #tpu.dot_dimension_numbers<[1], [0], [0], [1], [0, 0, 1, 1], [], []>} : vector<8x32xf32>, vector<32x96xf32>, vector<8x96xf32> -> vector<8x96xf32>
    %c1_31 = arith.constant 1 : index
    %c0_32 = arith.constant 0 : index
    %c0_33 = arith.constant 0 : index
    %52 = vector.load %arg3[%c1_31, %c0_32, %c0_33] : memref<2x32x96xf32, #tpu.memory_space<vmem>>, vector<1x32x96xf32>
    %53 = vector.shape_cast %52 : vector<1x32x96xf32> to vector<32x96xf32>
    %cst_34 = arith.constant dense<0.000000e+00> : vector<8x96xf32>
    %54 = tpu.matmul %48, %53, %cst_34 {dimension_numbers = #tpu.dot_dimension_numbers<[1], [0], [0], [1], [0, 0, 1, 1], [], []>} : vector<8x32xf32>, vector<32x96xf32>, vector<8x96xf32> -> vector<8x96xf32>
    %c1_35 = arith.constant 1 : index
    %c0_36 = arith.constant 0 : index
    %55 = vector.load %arg4[%c1_35, %c0_36] : memref<3x128xf32, #tpu.memory_space<vmem>>, vector<1x64xf32>
    %c1_37 = arith.constant 1 : index
    %c64_38 = arith.constant 64 : index
    %56 = vector.load %arg4[%c1_37, %c64_38] : memref<3x128xf32, #tpu.memory_space<vmem>>, vector<1x32xf32>
    %c1_39 = arith.constant 1 : index
    %c96_40 = arith.constant 96 : index
    %57 = vector.load %arg4[%c1_39, %c96_40] : memref<3x128xf32, #tpu.memory_space<vmem>>, vector<1x32xf32>
    %58 = vector.extract_strided_slice %51 {offsets = [0, 0], sizes = [8, 64], strides = [1, 1]} : vector<8x96xf32> to vector<8x64xf32>
    %59 = vector.extract_strided_slice %54 {offsets = [0, 0], sizes = [8, 64], strides = [1, 1]} : vector<8x96xf32> to vector<8x64xf32>
    %60 = arith.addf %58, %59 : vector<8x64xf32>
    %61 = vector.broadcast %55 : vector<1x64xf32> to vector<8x64xf32>
    %62 = arith.addf %60, %61 : vector<8x64xf32>
    %63 = arith.negf %62 : vector<8x64xf32>
    %64 = math.exp %63 : vector<8x64xf32>
    %cst_41 = arith.constant 1.000000e+00 : f32
    %65 = vector.broadcast %cst_41 : f32 to vector<8x64xf32>
    %66 = arith.addf %65, %64 : vector<8x64xf32>
    %67 = arith.divf %65, %66 : vector<8x64xf32>
    %68 = vector.extract_strided_slice %67 {offsets = [0, 0], sizes = [8, 32], strides = [1, 1]} : vector<8x64xf32> to vector<8x32xf32>
    %69 = vector.extract_strided_slice %67 {offsets = [0, 32], sizes = [8, 32], strides = [1, 1]} : vector<8x64xf32> to vector<8x32xf32>
    %70 = vector.extract_strided_slice %51 {offsets = [0, 64], sizes = [8, 32], strides = [1, 1]} : vector<8x96xf32> to vector<8x32xf32>
    %71 = vector.broadcast %56 : vector<1x32xf32> to vector<8x32xf32>
    %72 = arith.addf %70, %71 : vector<8x32xf32>
    %73 = vector.extract_strided_slice %54 {offsets = [0, 64], sizes = [8, 32], strides = [1, 1]} : vector<8x96xf32> to vector<8x32xf32>
    %74 = vector.broadcast %57 : vector<1x32xf32> to vector<8x32xf32>
    %75 = arith.addf %73, %74 : vector<8x32xf32>
    %76 = arith.mulf %68, %75 : vector<8x32xf32>
    %77 = arith.addf %72, %76 : vector<8x32xf32>
    %78 = math.tanh %77 : vector<8x32xf32>
    %79 = arith.subf %48, %78 : vector<8x32xf32>
    %80 = arith.mulf %69, %79 : vector<8x32xf32>
    %81 = arith.addf %78, %80 : vector<8x32xf32>
    %c1_42 = arith.constant 1 : index
    %c0_43 = arith.constant 0 : index
    %c0_44 = arith.constant 0 : index
    %82 = vector.load %arg8[%c1_42, %c0_43, %c0_44] : memref<2x8x32xf32, #tpu.memory_space<vmem>>, vector<1x8x32xf32>
    %83 = vector.shape_cast %82 : vector<1x8x32xf32> to vector<8x32xf32>
    %84 = vector.shape_cast %81 : vector<8x32xf32> to vector<1x8x32xf32>
    tpu.vector_store %arg8[%c1_42, %c0_43, %c0_44], %84 {strides = array<i32>} : memref<2x8x32xf32, #tpu.memory_space<vmem>>, vector<1x8x32xf32>,
    %c0_45 = arith.constant 0 : index
    %c0_46 = arith.constant 0 : index
    %85 = vector.load %arg6[%c0_45, %c0_46] : memref<32x4xf32, #tpu.memory_space<vmem>>, vector<32x4xf32>
    %cst_47 = arith.constant dense<0.000000e+00> : vector<8x4xf32>
    %86 = tpu.matmul %81, %85, %cst_47 {dimension_numbers = #tpu.dot_dimension_numbers<[1], [0], [0], [1], [0, 0, 1, 1], [], []>} : vector<8x32xf32>, vector<32x4xf32>, vector<8x4xf32> -> vector<8x4xf32>
    %87 = vector.broadcast %1 : vector<1x4xf32> to vector<8x4xf32>
    %88 = arith.addf %86, %87 : vector<8x4xf32>
    %c0_48 = arith.constant 0 : index
    %c0_49 = arith.constant 0 : index
    %89 = vector.load %arg7[%c0_48, %c0_49] : memref<8x4xf32, #tpu.memory_space<vmem>>, vector<8x4xf32>
    tpu.vector_store %arg7[%c0_48, %c0_49], %88 {strides = array<i32>} : memref<8x4xf32, #tpu.memory_space<vmem>>, vector<8x4xf32>,
    return
  }
}

</mosaic_0001>

<llo_original>
// kernel: _dqn_gru_forward_jit.1
$region0: #{_dqn_gru_forward_jit.1}
  #allocation0 [shape = 'u32[]', space=smem, size = 0x4, offset = 0x4, fixed_abs, tag = 'smem constant byte address 0x4 - core index']
  #allocation1 [shape = 'u32[144,128]{1,0:T(1,128)}', space=vmem, size = 0x12000, scoped, tag = 'internal scratch']
  %s0 = inlined_call_operand.vmem [shape: f32[8,16], index: 0, kind: input, shape index: {}]
  %s1 = inlined_call_operand.hbm [shape: f32[16,32], index: 1, kind: input, shape index: {}]
  %s2 = inlined_call_operand.vmem [shape: f32[2,32,96], index: 2, kind: input, shape index: {}]
  %s3 = inlined_call_operand.hbm [shape: f32[2,32,96], index: 3, kind: input, shape index: {}]
  %s4 = inlined_call_operand.hbm [shape: f32[3,128], index: 4, kind: input, shape index: {}]
  %s5 = inlined_call_operand.vmem [shape: f32[2,8,32], index: 5, kind: input, shape index: {}, may-alias: {5,8}]
  %s6 = inlined_call_operand.vmem [shape: f32[32,4], index: 6, kind: input, shape index: {}]
  %s7 = inlined_call_operand.vmem [shape: f32[8,4], index: 7, kind: output, shape index: {0}]
  %s8 = inlined_call_operand.vmem [shape: f32[2,8,32], index: 8, kind: output, shape index: {1}, may-alias: {5,8}]
  %9 = xla_tuple %s7, %s8
  %s10 = sld [smem:[#allocation0]]
  $region58: #{_dqn_gru_forward_jit.1} parent=0
    _
  %s12 = ssub.s32 1, %s10
  %s13 = scalar_select 0, %s12, %s10
  $region1: #{_dqn_gru_forward_jit.1} parent=0
    #allocation2 [shape = 'u8[8192]{0}', space=vmem, size = 0x2000, scoped, tag = 'input window, operand 1, single buffered']
    #allocation3 [shape = 's32[1]{0}', space=sflag, size = 0x4, scoped, tag = 'scoped memory for _dqn_gru_forward_jit.1']
    #allocation4 [shape = 'u8[32768]{0}', space=vmem, size = 0x8000, scoped, tag = 'input window, operand 3, single buffered']
    #allocation5 [shape = 's32[1]{0}', space=sflag, size = 0x4, scoped, tag = 'scoped memory for _dqn_gru_forward_jit.1']
    #allocation6 [shape = 'u8[2048]{0}', space=vmem, size = 0x800, scoped, tag = 'input window, operand 4, single buffered']
    %14 = vsyncpa [#allocation3], 0
    %15 = vsyncpa [#allocation5], 0
    // Predicated region
    $region2: #{_dqn_gru_forward_jit.1} parent=1 // pred_check
      _
    $region3: #{_dqn_gru_forward_jit.1} parent=1 // pred_check_branch
      %17 = sbr.rel (0) target = $region5
    $region4: #{_dqn_gru_forward_jit.1} parent=1 // pred_region
      _
    $region5: #{_dqn_gru_forward_jit.1} parent=1 // pred_fallthru
      _
    // Predicated region
    $region6: #{_dqn_gru_forward_jit.1} parent=1 // pred_check
      _
    $region7: #{_dqn_gru_forward_jit.1} parent=1 // pred_check_branch
      %19 = sbr.rel (0) target = $region9
    $region8: #{_dqn_gru_forward_jit.1} parent=1 // pred_region
      %s21 = ssub.s32 256, 256
      %22 = vsyncadd [#allocation3], %s21
      %s23 = sshll.u32 [#allocation2], 4
      %s24 = int_to_ptr.vmem [resolvable:$true] %s23
      %29 = dma.hbm_to_vmem [thread:$0]  %s1, 256, %s24, [#allocation3], 128, 128, 8
    $region9: #{_dqn_gru_forward_jit.1} parent=1 // pred_fallthru
      _
    // Predicated region
    $region10: #{_dqn_gru_forward_jit.1} parent=1 // pred_check
      _
    $region11: #{_dqn_gru_forward_jit.1} parent=1 // pred_check_branch
      %31 = sbr.rel (0) target = $region13
    $region12: #{_dqn_gru_forward_jit.1} parent=1 // pred_region
      _
    $region13: #{_dqn_gru_forward_jit.1} parent=1 // pred_fallthru
      _
    // Predicated region
    $region14: #{_dqn_gru_forward_jit.1} parent=1 // pred_check
      _
    $region15: #{_dqn_gru_forward_jit.1} parent=1 // pred_check_branch
      %33 = sbr.rel (0) target = $region17
    $region16: #{_dqn_gru_forward_jit.1} parent=1 // pred_region
      %s35 = ssub.s32 1024, 1024
      %36 = vsyncadd [#allocation5], %s35
      %s37 = sshll.u32 [#allocation4], 4
      %s38 = int_to_ptr.vmem [resolvable:$true] %s37
      %43 = dma.hbm_to_vmem [thread:$0]  %s3, 1024, %s38, [#allocation5], 128, 128, 8
    $region17: #{_dqn_gru_forward_jit.1} parent=1 // pred_fallthru
      _
    // Predicated region
    $region18: #{_dqn_gru_forward_jit.1} parent=1 // pred_check
      _
    $region19: #{_dqn_gru_forward_jit.1} parent=1 // pred_check_branch
      %45 = sbr.rel (0) target = $region21
    $region20: #{_dqn_gru_forward_jit.1} parent=1 // pred_region
      %s47 = ssub.s32 64, 64
      %48 = vsyncadd [#allocation5], %s47
      %s50 = sshll.u32 [#allocation6], 4
      %s51 = int_to_ptr.vmem [resolvable:$true] %s50
      %53 = dma.hbm_to_vmem [thread:$0]  %s4, 64, %s51, [#allocation5]
    $region21: #{_dqn_gru_forward_jit.1} parent=1 // pred_fallthru
      _
    // Predicated region
    $region22: #{_dqn_gru_forward_jit.1} parent=1 // pred_check
      _
    $region23: #{_dqn_gru_forward_jit.1} parent=1 // pred_check_branch
      %55 = sbr.rel (0) target = $region25
    $region24: #{_dqn_gru_forward_jit.1} parent=1 // pred_region
      _
    $region25: #{_dqn_gru_forward_jit.1} parent=1 // pred_fallthru
      _
    // Predicated region
    $region26: #{_dqn_gru_forward_jit.1} parent=1 // pred_check
      _
    $region27: #{_dqn_gru_forward_jit.1} parent=1 // pred_check_branch
      %57 = sbr.rel (0) target = $region29
    $region28: #{_dqn_gru_forward_jit.1} parent=1 // pred_region
      _
    $region29: #{_dqn_gru_forward_jit.1} parent=1 // pred_fallthru
      _
    // Predicated region
    $region30: #{_dqn_gru_forward_jit.1} parent=1 // pred_check
      _
    $region31: #{_dqn_gru_forward_jit.1} parent=1 // pred_check_branch
      %59 = sbr.rel (0) target = $region33
    $region32: #{_dqn_gru_forward_jit.1} parent=1 // pred_region
      %60 = dma.done [#allocation3], 256
    $region33: #{_dqn_gru_forward_jit.1} parent=1 // pred_fallthru
      _
    // Predicated region
    $region34: #{_dqn_gru_forward_jit.1} parent=1 // pred_check
      _
    $region35: #{_dqn_gru_forward_jit.1} parent=1 // pred_check_branch
      %62 = sbr.rel (0) target = $region37
    $region36: #{_dqn_gru_forward_jit.1} parent=1 // pred_region
      %63 = dma.done [#allocation5], 1024
    $region37: #{_dqn_gru_forward_jit.1} parent=1 // pred_fallthru
      _
    // Predicated region
    $region38: #{_dqn_gru_forward_jit.1} parent=1 // pred_check
      _
    $region39: #{_dqn_gru_forward_jit.1} parent=1 // pred_check_branch
      %65 = sbr.rel (0) target = $region41
    $region40: #{_dqn_gru_forward_jit.1} parent=1 // pred_region
      %66 = dma.done [#allocation5], 64
    $region41: #{_dqn_gru_forward_jit.1} parent=1 // pred_fallthru
      _
    %v67 = vld [vmem:[#allocation6 + $0x2] sm:$0x1]
    %v68 = vld [vmem:[%s0] sm:$0xff]
    %v69 = vld [vmem:[#allocation2] sm:$0xff]
    %v70 = vld [vmem:[#allocation2 + $0x8] sm:$0xff]
    %v71 = vlaneseq
    %v72 = vshrl.u32 %v71, 7
    %v73 = vsub.s32 0, %v72
    %v74 = vrot.slane %v67, %v73
    %vm75 = vcmask 130048
    %v77 = vsel %vm75, %v68, 0
    %79 = vmatprep.subr.mxu0 0.0
    %80 = vmatpush1.msra.mxu0 0.0
    %81 = vmatprep.subr.mxu0 0.0
    %82 = vmatpush1.msra.mxu0 0.0
    %83 = vmatprep.subr.mxu0 0.0
    %84 = vmatpush1.msra.mxu0 0.0
    %85 = vmatprep.subr.mxu0 0.0
    %86 = vmatpush1.msra.mxu0 0.0
    %87 = vmatprep.subr.mxu0 0.0
    %88 = vmatpush1.msra.mxu0 0.0
    %89 = vmatprep.subr.mxu0 0.0
    %90 = vmatpush1.msra.mxu0 0.0
    %91 = vmatprep.subr.mxu0 0.0
    %92 = vmatpush1.msra.mxu0 0.0
    %93 = vmatprep.subr.mxu0 0.0
    %94 = vmatpush1.msra.mxu0 0.0
    %95 = vmatprep.subr.mxu0 0.0
    %96 = vmatpush1.msra.mxu0 0.0
    %97 = vmatprep.subr.mxu0 0.0
    %98 = vmatpush1.msra.mxu0 0.0
    %99 = vmatprep.subr.mxu0 0.0
    %100 = vmatpush1.msra.mxu0 0.0
    %101 = vmatprep.subr.mxu0 0.0
    %102 = vmatpush1.msra.mxu0 0.0
    %103 = vmatprep.subr.mxu0 0.0
    %104 = vmatpush1.msra.mxu0 0.0
    %105 = vmatprep.subr.mxu0 0.0
    %106 = vmatpush1.msra.mxu0 0.0
    %107 = vmatprep.subr.mxu0 0.0
    %108 = vmatpush1.msra.mxu0 %v70
    %109 = vmatprep.subr.mxu0 0.0
    %110 = vmatpush1.msra.mxu0 %v69
    %111 = vmatprep.subr.mxu0 0.0
    %112 = vmatpush2.msra.mxu0 0.0
    %113 = vmatprep.subr.mxu0 0.0
    %114 = vmatpush2.msra.mxu0 0.0
    %115 = vmatprep.subr.mxu0 0.0
    %116 = vmatpush2.msra.mxu0 0.0
    %117 = vmatprep.subr.mxu0 0.0
    %118 = vmatpush2.msra.mxu0 0.0
    %119 = vmatprep.subr.mxu0 0.0
    %120 = vmatpush2.msra.mxu0 0.0
    %121 = vmatprep.subr.mxu0 0.0
    %122 = vmatpush2.msra.mxu0 0.0
    %123 = vmatprep.subr.mxu0 0.0
    %124 = vmatpush2.msra.mxu0 0.0
    %125 = vmatprep.subr.mxu0 0.0
    %126 = vmatpush2.msra.mxu0 0.0
    %127 = vmatprep.subr.mxu0 0.0
    %128 = vmatpush2.msra.mxu0 0.0
    %129 = vmatprep.subr.mxu0 0.0
    %130 = vmatpush2.msra.mxu0 0.0
    %131 = vmatprep.subr.mxu0 0.0
    %132 = vmatpush2.msra.mxu0 0.0
    %133 = vmatprep.subr.mxu0 0.0
    %134 = vmatpush2.msra.mxu0 0.0
    %135 = vmatprep.subr.mxu0 0.0
    %136 = vmatpush2.msra.mxu0 0.0
    %137 = vmatprep.subr.mxu0 0.0
    %138 = vmatpush2.msra.mxu0 0.0
    %139 = vmatprep.subr.mxu0 0.0
    %140 = vmatpush2.msra.mxu0 0.0
    %141 = vmatprep.subr.mxu0 0.0
    %142 = vmatpush2.msra.mxu0 0.0
    %143 = vmatprep.mubr.f32.mxu0 0.0
    %144 = vmatmul.mubr.f32.gmra.mxu0 %v77
    %v145 = vpop.f32.mrf.mxu0
    %v146 = vadd.f32 %v74, %v145
    %v147 = vpop.f32.mrf.mxu0
    %148 = vdwg.mxu0
    %v149 = vmax.f32 %v146, 0.0
    %v150 = vld [vmem:[%s5] sm:$0xff]
    %v151 = vld [vmem:[%s2] sm:$0xff]
    %v152 = vld [vmem:[%s2 + $0x8] sm:$0xff]
    %v153 = vld [vmem:[%s2 + $0x10] sm:$0xff]
    %v154 = vld [vmem:[%s2 + $0x18] sm:$0xff]
    %vm155 = vcmask 261120
    %v157 = vsel %vm155, %v149, 0
    %159 = vmatprep.subr.mxu0 0.0
    %160 = vmatpush1.msra.mxu0 0.0
    %161 = vmatprep.subr.mxu0 0.0
    %162 = vmatpush1.msra.mxu0 0.0
    %163 = vmatprep.subr.mxu0 0.0
    %164 = vmatpush1.msra.mxu0 0.0
    %165 = vmatprep.subr.mxu0 0.0
    %166 = vmatpush1.msra.mxu0 0.0
    %167 = vmatprep.subr.mxu0 0.0
    %168 = vmatpush1.msra.mxu0 0.0
    %169 = vmatprep.subr.mxu0 0.0
    %170 = vmatpush1.msra.mxu0 0.0
    %171 = vmatprep.subr.mxu0 0.0
    %172 = vmatpush1.msra.mxu0 0.0
    %173 = vmatprep.subr.mxu0 0.0
    %174 = vmatpush1.msra.mxu0 0.0
    %175 = vmatprep.subr.mxu0 0.0
    %176 = vmatpush1.msra.mxu0 0.0
    %177 = vmatprep.subr.mxu0 0.0
    %178 = vmatpush1.msra.mxu0 0.0
    %179 = vmatprep.subr.mxu0 0.0
    %180 = vmatpush1.msra.mxu0 0.0
    %181 = vmatprep.subr.mxu0 0.0
    %182 = vmatpush1.msra.mxu0 0.0
    %183 = vmatprep.subr.mxu0 0.0
    %184 = vmatpush1.msra.mxu0 %v154
    %185 = vmatprep.subr.mxu0 0.0
    %186 = vmatpush1.msra.mxu0 %v153
    %187 = vmatprep.subr.mxu0 0.0
    %188 = vmatpush1.msra.mxu0 %v152
    %189 = vmatprep.subr.mxu0 0.0
    %190 = vmatpush1.msra.mxu0 %v151
    %191 = vmatprep.subr.mxu0 0.0
    %192 = vmatpush2.msra.mxu0 0.0
    %193 = vmatprep.subr.mxu0 0.0
    %194 = vmatpush2.msra.mxu0 0.0
    %195 = vmatprep.subr.mxu0 0.0
    %196 = vmatpush2.msra.mxu0 0.0
    %197 = vmatprep.subr.mxu0 0.0
    %198 = vmatpush2.msra.mxu0 0.0
    %199 = vmatprep.subr.mxu0 0.0
    %200 = vmatpush2.msra.mxu0 0.0
    %201 = vmatprep.subr.mxu0 0.0
    %202 = vmatpush2.msra.mxu0 0.0
    %203 = vmatprep.subr.mxu0 0.0
    %204 = vmatpush2.msra.mxu0 0.0
    %205 = vmatprep.subr.mxu0 0.0
    %206 = vmatpush2.msra.mxu0 0.0
    %207 = vmatprep.subr.mxu0 0.0
    %208 = vmatpush2.msra.mxu0 0.0
    %209 = vmatprep.subr.mxu0 0.0
    %210 = vmatpush2.msra.mxu0 0.0
    %211 = vmatprep.subr.mxu0 0.0
    %212 = vmatpush2.msra.mxu0 0.0
    %213 = vmatprep.subr.mxu0 0.0
    %214 = vmatpush2.msra.mxu0 0.0
    %215 = vmatprep.subr.mxu0 0.0
    %216 = vmatpush2.msra.mxu0 0.0
    %217 = vmatprep.subr.mxu0 0.0
    %218 = vmatpush2.msra.mxu0 0.0
    %219 = vmatprep.subr.mxu0 0.0
    %220 = vmatpush2.msra.mxu0 0.0
    %221 = vmatprep.subr.mxu0 0.0
    %222 = vmatpush2.msra.mxu0 0.0
    %223 = vmatprep.mubr.f32.mxu0 0.0
    %224 = vmatmul.mubr.f32.gmra.mxu0 %v157
    %v225 = vpop.f32.mrf.mxu0
    %v226 = vadd.f32 0.0, %v225
    %v227 = vpop.f32.mrf.mxu0
    %228 = vdwg.mxu0
    %v229 = vld [vmem:[#allocation4] sm:$0xff]
    %v230 = vld [vmem:[#allocation4 + $0x8] sm:$0xff]
    %v231 = vld [vmem:[#allocation4 + $0x10] sm:$0xff]
    %v232 = vld [vmem:[#allocation4 + $0x18] sm:$0xff]
    %v234 = vsel %vm155, %v150, 0
    %236 = vmatprep.subr.mxu0 0.0
    %237 = vmatpush1.msra.mxu0 0.0
    %238 = vmatprep.subr.mxu0 0.0
    %239 = vmatpush1.msra.mxu0 0.0
    %240 = vmatprep.subr.mxu0 0.0
    %241 = vmatpush1.msra.mxu0 0.0
    %242 = vmatprep.subr.mxu0 0.0
    %243 = vmatpush1.msra.mxu0 0.0
    %244 = vmatprep.subr.mxu0 0.0
    %245 = vmatpush1.msra.mxu0 0.0
    %246 = vmatprep.subr.mxu0 0.0
    %247 = vmatpush1.msra.mxu0 0.0
    %248 = vmatprep.subr.mxu0 0.0
    %249 = vmatpush1.msra.mxu0 0.0
    %250 = vmatprep.subr.mxu0 0.0
    %251 = vmatpush1.msra.mxu0 0.0
    %252 = vmatprep.subr.mxu0 0.0
    %253 = vmatpush1.msra.mxu0 0.0
    %254 = vmatprep.subr.mxu0 0.0
    %255 = vmatpush1.msra.mxu0 0.0
    %256 = vmatprep.subr.mxu0 0.0
    %257 = vmatpush1.msra.mxu0 0.0
    %258 = vmatprep.subr.mxu0 0.0
    %259 = vmatpush1.msra.mxu0 0.0
    %260 = vmatprep.subr.mxu0 0.0
    %261 = vmatpush1.msra.mxu0 %v232
    %262 = vmatprep.subr.mxu0 0.0
    %263 = vmatpush1.msra.mxu0 %v231
    %264 = vmatprep.subr.mxu0 0.0
    %265 = vmatpush1.msra.mxu0 %v230
    %266 = vmatprep.subr.mxu0 0.0
    %267 = vmatpush1.msra.mxu0 %v229
    %268 = vmatprep.subr.mxu0 0.0
    %269 = vmatpush2.msra.mxu0 0.0
    %270 = vmatprep.subr.mxu0 0.0
    %271 = vmatpush2.msra.mxu0 0.0
    %272 = vmatprep.subr.mxu0 0.0
    %273 = vmatpush2.msra.mxu0 0.0
    %274 = vmatprep.subr.mxu0 0.0
    %275 = vmatpush2.msra.mxu0 0.0
    %276 = vmatprep.subr.mxu0 0.0
    %277 = vmatpush2.msra.mxu0 0.0
    %278 = vmatprep.subr.mxu0 0.0
    %279 = vmatpush2.msra.mxu0 0.0
    %280 = vmatprep.subr.mxu0 0.0
    %281 = vmatpush2.msra.mxu0 0.0
    %282 = vmatprep.subr.mxu0 0.0
    %283 = vmatpush2.msra.mxu0 0.0
    %284 = vmatprep.subr.mxu0 0.0
    %285 = vmatpush2.msra.mxu0 0.0
    %286 = vmatprep.subr.mxu0 0.0
    %287 = vmatpush2.msra.mxu0 0.0
    %288 = vmatprep.subr.mxu0 0.0
    %289 = vmatpush2.msra.mxu0 0.0
    %290 = vmatprep.subr.mxu0 0.0
    %291 = vmatpush2.msra.mxu0 0.0
    %292 = vmatprep.subr.mxu0 0.0
    %293 = vmatpush2.msra.mxu0 0.0
    %294 = vmatprep.subr.mxu0 0.0
    %295 = vmatpush2.msra.mxu0 0.0
    %296 = vmatprep.subr.mxu0 0.0
    %297 = vmatpush2.msra.mxu0 0.0
    %298 = vmatprep.subr.mxu0 0.0
    %299 = vmatpush2.msra.mxu0 0.0
    %300 = vmatprep.mubr.f32.mxu0 0.0
    %301 = vmatmul.mubr.f32.gmra.mxu0 %v234
    %v302 = vpop.f32.mrf.mxu0
    %v303 = vadd.f32 0.0, %v302
    %v304 = vpop.f32.mrf.mxu0
    %305 = vdwg.mxu0
    %v306 = vld [vmem:[#allocation6] sm:$0x1]
    %v307 = vadd.f32 %v226, %v303
    %v308 = vlaneseq
    %v309 = vshrl.u32 %v308, 7
    %v310 = vsub.s32 0, %v309
    %v311 = vrot.slane %v306, %v310
    %v312 = vadd.f32 %v307, %v311
    %v313 = vxor.u32 %v312, 2147483648
    %v314 = vmul.f32 %v313, 1.442695
    %v315 = vpow.pop %v314
    %v316 = vadd.f32 %v315, 1.0
    %v317 = vrcp.pop %v316
    %v318 = vmul.f32 1.0, %v317
    %v319 = vadd.f32 %v226, %v311
    %321 = vrot.lane.b32.xlu0 %v311, 96
    %v322 = vpop.permute.xlu0 %321
    %v324 = vadd.f32 %v303, %v322
    %326 = vrot.lane.b32.xlu0 %v324, 64
    %v327 = vpop.permute.xlu0 %326
    %v329 = vmul.f32 %v318, %v327
    %331 = vrot.lane.b32.xlu0 %v329, 64
    %v332 = vpop.permute.xlu0 %331
    %v334 = vadd.f32 %v319, %v332
    %v335 = vtanh.pop %v334
    %337 = vrot.lane.b32.xlu0 %v335, 64
    %v338 = vpop.permute.xlu0 %337
    %v340 = vsub.f32 %v150, %v338
    %342 = vrot.lane.b32.xlu0 %v340, 32
    %v343 = vpop.permute.xlu0 %342
    %v345 = vmul.f32 %v318, %v343
    %347 = vrot.lane.b32.xlu0 %v345, 32
    %v348 = vpop.permute.xlu0 %347
    %v350 = vadd.f32 %v335, %v348
    %352 = vrot.lane.b32.xlu0 %v350, 64
    %v353 = vpop.permute.xlu0 %352
    %355 = vst.msk [vmem:[%s8] sm:$0xff] %vm155, %v353
    %s356 = scalar_lea.vmem %s5, 8
    %v357 = vld [vmem:[%s356] sm:$0xff]
    %s358 = scalar_lea.vmem %s2, 32
    %v359 = vld [vmem:[%s358] sm:$0xff]
    %v360 = vld [vmem:[%s358 + $0x8] sm:$0xff]
    %v361 = vld [vmem:[%s358 + $0x10] sm:$0xff]
    %v362 = vld [vmem:[%s358 + $0x18] sm:$0xff]
    %v363 = vsel %vm155, %v353, 0
    %365 = vmatprep.subr.mxu0 0.0
    %366 = vmatpush1.msra.mxu0 0.0
    %367 = vmatprep.subr.mxu0 0.0
    %368 = vmatpush1.msra.mxu0 0.0
    %369 = vmatprep.subr.mxu0 0.0
    %370 = vmatpush1.msra.mxu0 0.0
    %371 = vmatprep.subr.mxu0 0.0
    %372 = vmatpush1.msra.mxu0 0.0
    %373 = vmatprep.subr.mxu0 0.0
    %374 = vmatpush1.msra.mxu0 0.0
    %375 = vmatprep.subr.mxu0 0.0
    %376 = vmatpush1.msra.mxu0 0.0
    %377 = vmatprep.subr.mxu0 0.0
    %378 = vmatpush1.msra.mxu0 0.0
    %379 = vmatprep.subr.mxu0 0.0
    %380 = vmatpush1.msra.mxu0 0.0
    %381 = vmatprep.subr.mxu0 0.0
    %382 = vmatpush1.msra.mxu0 0.0
    %383 = vmatprep.subr.mxu0 0.0
    %384 = vmatpush1.msra.mxu0 0.0
    %385 = vmatprep.subr.mxu0 0.0
    %386 = vmatpush1.msra.mxu0 0.0
    %387 = vmatprep.subr.mxu0 0.0
    %388 = vmatpush1.msra.mxu0 0.0
    %389 = vmatprep.subr.mxu0 0.0
    %390 = vmatpush1.msra.mxu0 %v362
    %391 = vmatprep.subr.mxu0 0.0
    %392 = vmatpush1.msra.mxu0 %v361
    %393 = vmatprep.subr.mxu0 0.0
    %394 = vmatpush1.msra.mxu0 %v360
    %395 = vmatprep.subr.mxu0 0.0
    %396 = vmatpush1.msra.mxu0 %v359
    %397 = vmatprep.subr.mxu0 0.0
    %398 = vmatpush2.msra.mxu0 0.0
    %399 = vmatprep.subr.mxu0 0.0
    %400 = vmatpush2.msra.mxu0 0.0
    %401 = vmatprep.subr.mxu0 0.0
    %402 = vmatpush2.msra.mxu0 0.0
    %403 = vmatprep.subr.mxu0 0.0
    %404 = vmatpush2.msra.mxu0 0.0
    %405 = vmatprep.subr.mxu0 0.0
    %406 = vmatpush2.msra.mxu0 0.0
    %407 = vmatprep.subr.mxu0 0.0
    %408 = vmatpush2.msra.mxu0 0.0
    %409 = vmatprep.subr.mxu0 0.0
    %410 = vmatpush2.msra.mxu0 0.0
    %411 = vmatprep.subr.mxu0 0.0
    %412 = vmatpush2.msra.mxu0 0.0
    %413 = vmatprep.subr.mxu0 0.0
    %414 = vmatpush2.msra.mxu0 0.0
    %415 = vmatprep.subr.mxu0 0.0
    %416 = vmatpush2.msra.mxu0 0.0
    %417 = vmatprep.subr.mxu0 0.0
    %418 = vmatpush2.msra.mxu0 0.0
    %419 = vmatprep.subr.mxu0 0.0
    %420 = vmatpush2.msra.mxu0 0.0
    %421 = vmatprep.subr.mxu0 0.0
    %422 = vmatpush2.msra.mxu0 0.0
    %423 = vmatprep.subr.mxu0 0.0
    %424 = vmatpush2.msra.mxu0 0.0
    %425 = vmatprep.subr.mxu0 0.0
    %426 = vmatpush2.msra.mxu0 0.0
    %427 = vmatprep.subr.mxu0 0.0
    %428 = vmatpush2.msra.mxu0 0.0
    %429 = vmatprep.mubr.f32.mxu0 0.0
    %430 = vmatmul.mubr.f32.gmra.mxu0 %v363
    %v431 = vpop.f32.mrf.mxu0
    %v432 = vadd.f32 0.0, %v431
    %v433 = vpop.f32.mrf.mxu0
    %434 = vdwg.mxu0
    %s435 = scalar_lea.vmem [#allocation4], 32
    %v436 = vld [vmem:[%s435] sm:$0xff]
    %v437 = vld [vmem:[%s435 + $0x8] sm:$0xff]
    %v438 = vld [vmem:[%s435 + $0x10] sm:$0xff]
    %v439 = vld [vmem:[%s435 + $0x18] sm:$0xff]
    %v441 = vsel %vm155, %v357, 0
    %443 = vmatprep.subr.mxu0 0.0
    %444 = vmatpush1.msra.mxu0 0.0
    %445 = vmatprep.subr.mxu0 0.0
    %446 = vmatpush1.msra.mxu0 0.0
    %447 = vmatprep.subr.mxu0 0.0
    %448 = vmatpush1.msra.mxu0 0.0
    %449 = vmatprep.subr.mxu0 0.0
    %450 = vmatpush1.msra.mxu0 0.0
    %451 = vmatprep.subr.mxu0 0.0
    %452 = vmatpush1.msra.mxu0 0.0
    %453 = vmatprep.subr.mxu0 0.0
    %454 = vmatpush1.msra.mxu0 0.0
    %455 = vmatprep.subr.mxu0 0.0
    %456 = vmatpush1.msra.mxu0 0.0
    %457 = vmatprep.subr.mxu0 0.0
    %458 = vmatpush1.msra.mxu0 0.0
    %459 = vmatprep.subr.mxu0 0.0
    %460 = vmatpush1.msra.mxu0 0.0
    %461 = vmatprep.subr.mxu0 0.0
    %462 = vmatpush1.msra.mxu0 0.0
    %463 = vmatprep.subr.mxu0 0.0
    %464 = vmatpush1.msra.mxu0 0.0
    %465 = vmatprep.subr.mxu0 0.0
    %466 = vmatpush1.msra.mxu0 0.0
    %467 = vmatprep.subr.mxu0 0.0
    %468 = vmatpush1.msra.mxu0 %v439
    %469 = vmatprep.subr.mxu0 0.0
    %470 = vmatpush1.msra.mxu0 %v438
    %471 = vmatprep.subr.mxu0 0.0
    %472 = vmatpush1.msra.mxu0 %v437
    %473 = vmatprep.subr.mxu0 0.0
    %474 = vmatpush1.msra.mxu0 %v436
    %475 = vmatprep.subr.mxu0 0.0
    %476 = vmatpush2.msra.mxu0 0.0
    %477 = vmatprep.subr.mxu0 0.0
    %478 = vmatpush2.msra.mxu0 0.0
    %479 = vmatprep.subr.mxu0 0.0
    %480 = vmatpush2.msra.mxu0 0.0
    %481 = vmatprep.subr.mxu0 0.0
    %482 = vmatpush2.msra.mxu0 0.0
    %483 = vmatprep.subr.mxu0 0.0
    %484 = vmatpush2.msra.mxu0 0.0
    %485 = vmatprep.subr.mxu0 0.0
    %486 = vmatpush2.msra.mxu0 0.0
    %487 = vmatprep.subr.mxu0 0.0
    %488 = vmatpush2.msra.mxu0 0.0
    %489 = vmatprep.subr.mxu0 0.0
    %490 = vmatpush2.msra.mxu0 0.0
    %491 = vmatprep.subr.mxu0 0.0
    %492 = vmatpush2.msra.mxu0 0.0
    %493 = vmatprep.subr.mxu0 0.0
    %494 = vmatpush2.msra.mxu0 0.0
    %495 = vmatprep.subr.mxu0 0.0
    %496 = vmatpush2.msra.mxu0 0.0
    %497 = vmatprep.subr.mxu0 0.0
    %498 = vmatpush2.msra.mxu0 0.0
    %499 = vmatprep.subr.mxu0 0.0
    %500 = vmatpush2.msra.mxu0 0.0
    %501 = vmatprep.subr.mxu0 0.0
    %502 = vmatpush2.msra.mxu0 0.0
    %503 = vmatprep.subr.mxu0 0.0
    %504 = vmatpush2.msra.mxu0 0.0
    %505 = vmatprep.subr.mxu0 0.0
    %506 = vmatpush2.msra.mxu0 0.0
    %507 = vmatprep.mubr.f32.mxu0 0.0
    %508 = vmatmul.mubr.f32.gmra.mxu0 %v441
    %v509 = vpop.f32.mrf.mxu0
    %v510 = vadd.f32 0.0, %v509
    %v511 = vpop.f32.mrf.mxu0
    %512 = vdwg.mxu0
    %v513 = vld [vmem:[#allocation6 + $0x1] sm:$0x1]
    %v514 = vadd.f32 %v432, %v510
    %v515 = vlaneseq
    %v516 = vshrl.u32 %v515, 7
    %v517 = vsub.s32 0, %v516
    %v518 = vrot.slane %v513, %v517
    %v519 = vadd.f32 %v514, %v518
    %v520 = vxor.u32 %v519, 2147483648
    %v521 = vmul.f32 %v520, 1.442695
    %v522 = vpow.pop %v521
    %v523 = vadd.f32 %v522, 1.0
    %v524 = vrcp.pop %v523
    %v525 = vmul.f32 1.0, %v524
    %v526 = vadd.f32 %v432, %v518
    %528 = vrot.lane.b32.xlu0 %v518, 96
    %v529 = vpop.permute.xlu0 %528
    %v531 = vadd.f32 %v510, %v529
    %533 = vrot.lane.b32.xlu0 %v531, 64
    %v534 = vpop.permute.xlu0 %533
    %v536 = vmul.f32 %v525, %v534
    %538 = vrot.lane.b32.xlu0 %v536, 64
    %v539 = vpop.permute.xlu0 %538
    %v541 = vadd.f32 %v526, %v539
    %v542 = vtanh.pop %v541
    %544 = vrot.lane.b32.xlu0 %v542, 64
    %v545 = vpop.permute.xlu0 %544
    %v547 = vsub.f32 %v357, %v545
    %549 = vrot.lane.b32.xlu0 %v547, 32
    %v550 = vpop.permute.xlu0 %549
    %v552 = vmul.f32 %v525, %v550
    %554 = vrot.lane.b32.xlu0 %v552, 32
    %v555 = vpop.permute.xlu0 %554
    %v557 = vadd.f32 %v542, %v555
    %559 = vrot.lane.b32.xlu0 %v557, 64
    %v560 = vpop.permute.xlu0 %559
    %s562 = scalar_lea.vmem %s8, 8
    %563 = vst.msk [vmem:[%s562] sm:$0xff] %vm155, %v560
    %v564 = vld [vmem:[%s6] sm:$0xff]
    %v565 = vld [vmem:[%s6 + $0x8] sm:$0xff]
    %v566 = vld [vmem:[%s6 + $0x10] sm:$0xff]
    %v567 = vld [vmem:[%s6 + $0x18] sm:$0xff]
    %569 = vrot.lane.b32.xlu0 %v74, 96
    %v570 = vpop.permute.xlu0 %569
    %v572 = vsel %vm155, %v560, 0
    %574 = vmatprep.subr.mxu0 0.0
    %575 = vmatpush1.msra.mxu0 0.0
    %576 = vmatprep.subr.mxu0 0.0
    %577 = vmatpush1.msra.mxu0 0.0
    %578 = vmatprep.subr.mxu0 0.0
    %579 = vmatpush1.msra.mxu0 0.0
    %580 = vmatprep.subr.mxu0 0.0
    %581 = vmatpush1.msra.mxu0 0.0
    %582 = vmatprep.subr.mxu0 0.0
    %583 = vmatpush1.msra.mxu0 0.0
    %584 = vmatprep.subr.mxu0 0.0
    %585 = vmatpush1.msra.mxu0 0.0
    %586 = vmatprep.subr.mxu0 0.0
    %587 = vmatpush1.msra.mxu0 0.0
    %588 = vmatprep.subr.mxu0 0.0
    %589 = vmatpush1.msra.mxu0 0.0
    %590 = vmatprep.subr.mxu0 0.0
    %591 = vmatpush1.msra.mxu0 0.0
    %592 = vmatprep.subr.mxu0 0.0
    %593 = vmatpush1.msra.mxu0 0.0
    %594 = vmatprep.subr.mxu0 0.0
    %595 = vmatpush1.msra.mxu0 0.0
    %596 = vmatprep.subr.mxu0 0.0
    %597 = vmatpush1.msra.mxu0 0.0
    %598 = vmatprep.subr.mxu0 0.0
    %599 = vmatpush1.msra.mxu0 %v567
    %600 = vmatprep.subr.mxu0 0.0
    %601 = vmatpush1.msra.mxu0 %v566
    %602 = vmatprep.subr.mxu0 0.0
    %603 = vmatpush1.msra.mxu0 %v565
    %604 = vmatprep.subr.mxu0 0.0
    %605 = vmatpush1.msra.mxu0 %v564
    %606 = vmatprep.subr.mxu0 0.0
    %607 = vmatpush2.msra.mxu0 0.0
    %608 = vmatprep.subr.mxu0 0.0
    %609 = vmatpush2.msra.mxu0 0.0
    %610 = vmatprep.subr.mxu0 0.0
    %611 = vmatpush2.msra.mxu0 0.0
    %612 = vmatprep.subr.mxu0 0.0
    %613 = vmatpush2.msra.mxu0 0.0
    %614 = vmatprep.subr.mxu0 0.0
    %615 = vmatpush2.msra.mxu0 0.0
    %616 = vmatprep.subr.mxu0 0.0
    %617 = vmatpush2.msra.mxu0 0.0
    %618 = vmatprep.subr.mxu0 0.0
    %619 = vmatpush2.msra.mxu0 0.0
    %620 = vmatprep.subr.mxu0 0.0
    %621 = vmatpush2.msra.mxu0 0.0
    %622 = vmatprep.subr.mxu0 0.0
    %623 = vmatpush2.msra.mxu0 0.0
    %624 = vmatprep.subr.mxu0 0.0
    %625 = vmatpush2.msra.mxu0 0.0
    %626 = vmatprep.subr.mxu0 0.0
    %627 = vmatpush2.msra.mxu0 0.0
    %628 = vmatprep.subr.mxu0 0.0
    %629 = vmatpush2.msra.mxu0 0.0
    %630 = vmatprep.subr.mxu0 0.0
    %631 = vmatpush2.msra.mxu0 0.0
    %632 = vmatprep.subr.mxu0 0.0
    %633 = vmatpush2.msra.mxu0 0.0
    %634 = vmatprep.subr.mxu0 0.0
    %635 = vmatpush2.msra.mxu0 0.0
    %636 = vmatprep.subr.mxu0 0.0
    %637 = vmatpush2.msra.mxu0 0.0
    %638 = vmatprep.mubr.f32.mxu0 0.0
    %639 = vmatmul.mubr.f32.gmra.mxu0 %v572
    %v640 = vpop.f32.mrf.mxu0
    %v641 = vadd.f32 %v570, %v640
    %v642 = vpop.f32.mrf.mxu0
    %643 = vdwg.mxu0
    %vm644 = vcmask 31744
    %645 = vst.msk [vmem:[%s7] sm:$0xff] %vm644, %v641
    // Predicated region
    $region42: #{_dqn_gru_forward_jit.1} parent=1 // pred_check
      _
    $region43: #{_dqn_gru_forward_jit.1} parent=1 // pred_check_branch
      %647 = sbr.rel (0) target = $region45
    $region44: #{_dqn_gru_forward_jit.1} parent=1 // pred_region
      _
    $region45: #{_dqn_gru_forward_jit.1} parent=1 // pred_fallthru
      _
    // Predicated region
    $region46: #{_dqn_gru_forward_jit.1} parent=1 // pred_check
      _
    $region47: #{_dqn_gru_forward_jit.1} parent=1 // pred_check_branch
      %649 = sbr.rel (0) target = $region49
    $region48: #{_dqn_gru_forward_jit.1} parent=1 // pred_region
      _
    $region49: #{_dqn_gru_forward_jit.1} parent=1 // pred_fallthru
      _
    // Predicated region
    $region50: #{_dqn_gru_forward_jit.1} parent=1 // pred_check
      _
    $region51: #{_dqn_gru_forward_jit.1} parent=1 // pred_check_branch
      %651 = sbr.rel (0) target = $region53
    $region52: #{_dqn_gru_forward_jit.1} parent=1 // pred_region
      _
    $region53: #{_dqn_gru_forward_jit.1} parent=1 // pred_fallthru
      _
    // Predicated region
    $region54: #{_dqn_gru_forward_jit.1} parent=1 // pred_check
      _
    $region55: #{_dqn_gru_forward_jit.1} parent=1 // pred_check_branch
      %653 = sbr.rel (0) target = $region57
    $region56: #{_dqn_gru_forward_jit.1} parent=1 // pred_region
      _
    $region57: #{_dqn_gru_forward_jit.1} parent=1 // pred_fallthru
      _
    %654 = vsyncpa [#allocation3], 1
    %655 = vsyncpa [#allocation5], 1

</llo_original>
